<compile_context>
chip_gen: v7x
topology: tpu7x:2x2x1
jax: 0.10.0
libtpu: 0.0.40
codegen_flags: <defaults>
</compile_context>

<pallas_src>
import numpy as np

import jax
import jax.numpy as jnp
from jax.experimental import pallas as pl
from jax.experimental.pallas import tpu as pltpu

EPSILON = 1e-06


def _make_fused_kernel(eps_num_y: float, eps_num_x: float, eps_den: float):
    """Kernel computing y- and x-coordinates for one (1, c_tile, H*W) block."""

    def kernel(maps_ref, grids_ref, out_ref):
        m = maps_ref[0].astype(jnp.float32)        # (c_tile, HW)
        gy = grids_ref[0:1, :]                     # (1, HW) f32, y-grid (over H)
        gx = grids_ref[1:2, :]                     # (1, HW) f32, x-grid (over W)

        s = jnp.sum(m, axis=-1, keepdims=True)             # (c_tile, 1)
        num_y = jnp.sum(m * gy, axis=-1, keepdims=True)    # (c_tile, 1)
        num_x = jnp.sum(m * gx, axis=-1, keepdims=True)    # (c_tile, 1)

        inv_den = 1.0 / (s + eps_den)
        cy = (num_y + eps_num_y) * inv_den
        cx = (num_x + eps_num_x) * inv_den

        out_ref[0] = jnp.concatenate([cy, cx], axis=-1).astype(out_ref.dtype)

    return kernel


def feature_maps_to_coordinates_xy(maps: jax.Array):
    """Fused Pallas kernel: returns (coords_y, coords_x), each (N, C).

    coords_y corresponds to the PyTorch module with axis=2, coords_x to axis=3.
    """
    N, C, H, W = maps.shape
    HW = H * W
    maps_flat = maps.reshape(N, C, HW)             # free for contiguous NCHW

    # Flattened coordinate grids (torch.linspace semantics), built at trace time.
    gy_1d = np.linspace(-1.0, 1.0, H, dtype=np.float32) if H > 1 else np.array([-1.0], np.float32)
    gx_1d = np.linspace(1.0, -1.0, W, dtype=np.float32) if W > 1 else np.array([1.0], np.float32)
    gy_flat = np.repeat(gy_1d, W)                  # grid_y[h] broadcast over w
    gx_flat = np.tile(gx_1d, H)                    # grid_x[w] broadcast over h
    grids = jnp.asarray(np.stack([gy_flat, gx_flat], axis=0))   # (2, HW) f32

    # Epsilon corrections (the `maps + EPSILON` of the reference, moved after
    # the reduction): mathematically identical, removes a full-tile VPU add.
    eps_den = float(EPSILON) * H * W
    eps_num_y = float(EPSILON) * float(gy_flat.sum())
    eps_num_x = float(EPSILON) * float(gx_flat.sum())

    # Channel tiling: keep the double-buffered input block small enough for
    # v5e's 16 MiB default scoped VMEM (and far under v7x's 64 MiB physical).
    bytes_per_c = HW * maps_flat.dtype.itemsize
    budget = 6 * 1024 * 1024                       # per input block (x2 for double buffer)
    if C * bytes_per_c <= budget or C <= 128:
        c_tile = C
    else:
        c_tile = max(128, min(C, (budget // bytes_per_c) // 128 * 128))
    n_c_tiles = pl.cdiv(C, c_tile)
    # TODO(synk): extremely large single-channel maps (C small, H*W huge) would
    # additionally need H*W tiling with an accumulator; not needed at ULOSD sizes.

    out = pl.pallas_call(
        _make_fused_kernel(eps_num_y, eps_num_x, eps_den),
        out_shape=jax.ShapeDtypeStruct((N, C, 2), maps.dtype),
        grid=(N, n_c_tiles),
        in_specs=[
            pl.BlockSpec((1, c_tile, HW), lambda n, c: (n, c, 0)),
            pl.BlockSpec((2, HW), lambda n, c: (0, 0)),   # resident grids
        ],
        out_specs=pl.BlockSpec((1, c_tile, 2), lambda n, c: (n, c, 0)),
        compiler_params=pltpu.CompilerParams(
            dimension_semantics=("parallel", "parallel")),
    )(maps_flat, grids)

    return out[..., 0], out[..., 1]


def feature_maps_to_coordinates(maps: jax.Array, axis: int) -> jax.Array:
    """Matches FeatureMapsToCoordinates(axis).forward(maps) -> (N, C)."""
    if axis not in (2, 3):
        raise ValueError(f"Can not make coordinates for axis {axis}!")
    ys, xs = feature_maps_to_coordinates_xy(maps)
    return ys if axis == 2 else xs


def _reference(maps: jax.Array, axis: int) -> jax.Array:
    """Pure-JAX reference matching the PyTorch forward exactly."""
    width = maps.shape[axis]
    if axis == 2:
        grid = jnp.linspace(-1.0, 1.0, width).reshape(1, 1, width, 1)
        marg = 3
    else:
        grid = jnp.linspace(1.0, -1.0, width).reshape(1, 1, 1, width)
        marg = 2
    weights = jnp.sum(maps + EPSILON, axis=marg, keepdims=True)
    weights = weights / jnp.sum(weights, axis=axis, keepdims=True)
    coords = jnp.sum(weights * grid, axis=axis, keepdims=True)  # (N, C, 1, 1)
    return coords[:, :, 0, 0]


if __name__ == "__main__":
    key = jax.random.PRNGKey(0)
    N, C, H, W = 2, 4, 16, 16
    # Heatmap-like positive inputs.
    maps = jax.nn.softplus(jax.random.normal(key, (N, C, H, W), dtype=jnp.float32))

    ys, xs = feature_maps_to_coordinates_xy(maps)
    jax.block_until_ready((ys, xs))

    ok = True
    for axis, got in ((2, ys), (3, xs)):
        want = _reference(maps, axis)
        assert got.shape == (N, C), got.shape
        if not jnp.allclose(got, want, rtol=1e-5, atol=1e-5):
            ok = False

    # Also exercise the single-axis compatibility wrapper.
    got_y = jax.block_until_ready(feature_maps_to_coordinates(maps, 2))
    if not jnp.allclose(got_y, _reference(maps, 2), rtol=1e-5, atol=1e-5):
        ok = False

    if ok:
        print("KERNEL_OK")
</pallas_src>

<mosaic_0001>
module attributes {stable_mosaic.version = 11 : i64} {
  func.func @kernel(%arg0: i32, %arg1: i32, %arg2: memref<1x4x256xf32, #tpu.memory_space<vmem>>, %arg3: memref<2x256xf32, #tpu.memory_space<vmem>>, %arg4: memref<1x4x2xf32, #tpu.memory_space<vmem>>) attributes {dimension_semantics = [#tpu.dimension_semantics<parallel>, #tpu.dimension_semantics<parallel>], iteration_bounds = array<i64: 2, 1>, scalar_prefetch = 0 : i64, scratch_operands = 0 : i64, tpu.core_type = #tpu.core_type<tc>, window_params = [{transform_indices = @transform_0, window_bounds = array<i64: 1, 4, 256>}, {pipeline_mode = #tpu.pipeline_mode<synchronous>, transform_indices = @transform_1, window_bounds = array<i64: 2, 256>}, {transform_indices = @transform_2, window_bounds = array<i64: 1, 4, 2>}]} {
    %c0 = arith.constant 0 : index
    %c0_0 = arith.constant 0 : index
    %c0_1 = arith.constant 0 : index
    %0 = vector.load %arg2[%c0, %c0_0, %c0_1] : memref<1x4x256xf32, #tpu.memory_space<vmem>>, vector<1x4x256xf32>
    %1 = vector.shape_cast %0 : vector<1x4x256xf32> to vector<4x256xf32>
    %c0_2 = arith.constant 0 : index
    %c0_3 = arith.constant 0 : index
    %2 = vector.load %arg3[%c0_2, %c0_3] : memref<2x256xf32, #tpu.memory_space<vmem>>, vector<1x256xf32>
    %c1 = arith.constant 1 : index
    %c0_4 = arith.constant 0 : index
    %3 = vector.load %arg3[%c1, %c0_4] : memref<2x256xf32, #tpu.memory_space<vmem>>, vector<1x256xf32>
    %cst = arith.constant dense<0.000000e+00> : vector<4xf32>
    %4 = vector.multi_reduction <add>, %1, %cst [1] : vector<4x256xf32> to vector<4xf32>
    %5 = vector.shape_cast %4 : vector<4xf32> to vector<4x1xf32>
    %6 = vector.broadcast %2 : vector<1x256xf32> to vector<4x256xf32>
    %7 = arith.mulf %1, %6 : vector<4x256xf32>
    %cst_5 = arith.constant dense<0.000000e+00> : vector<4xf32>
    %8 = vector.multi_reduction <add>, %7, %cst_5 [1] : vector<4x256xf32> to vector<4xf32>
    %9 = vector.shape_cast %8 : vector<4xf32> to vector<4x1xf32>
    %10 = vector.broadcast %3 : vector<1x256xf32> to vector<4x256xf32>
    %11 = arith.mulf %1, %10 : vector<4x256xf32>
    %cst_6 = arith.constant dense<0.000000e+00> : vector<4xf32>
    %12 = vector.multi_reduction <add>, %11, %cst_6 [1] : vector<4x256xf32> to vector<4xf32>
    %13 = vector.shape_cast %12 : vector<4xf32> to vector<4x1xf32>
    %cst_7 = arith.constant 2.560000e-04 : f32
    %14 = vector.broadcast %cst_7 : f32 to vector<4x1xf32>
    %15 = arith.addf %5, %14 : vector<4x1xf32>
    %cst_8 = arith.constant 1.000000e+00 : f32
    %16 = vector.broadcast %cst_8 : f32 to vector<4x1xf32>
    %17 = arith.divf %16, %15 : vector<4x1xf32>
    %cst_9 = arith.constant 0.000000e+00 : f32
    %18 = vector.broadcast %cst_9 : f32 to vector<4x1xf32>
    %19 = arith.addf %9, %18 : vector<4x1xf32>
    %20 = arith.mulf %19, %17 : vector<4x1xf32>
    %cst_10 = arith.constant -3.81469726E-12 : f32
    %21 = vector.broadcast %cst_10 : f32 to vector<4x1xf32>
    %22 = arith.addf %13, %21 : vector<4x1xf32>
    %23 = arith.mulf %22, %17 : vector<4x1xf32>
    %24 = tpu.concatenate %20, %23 in 1 : vector<4x1xf32>, vector<4x1xf32> -> vector<4x2xf32>
    %c0_11 = arith.constant 0 : index
    %c0_12 = arith.constant 0 : index
    %c0_13 = arith.constant 0 : index
    %25 = vector.load %arg4[%c0_11, %c0_12, %c0_13] : memref<1x4x2xf32, #tpu.memory_space<vmem>>, vector<1x4x2xf32>
    %26 = vector.shape_cast %25 : vector<1x4x2xf32> to vector<4x2xf32>
    %27 = vector.shape_cast %24 : vector<4x2xf32> to vector<1x4x2xf32>
    tpu.vector_store %arg4[%c0_11, %c0_12, %c0_13], %27 {strides = array<i32>} : memref<1x4x2xf32, #tpu.memory_space<vmem>>, vector<1x4x2xf32>,
    return
  }
  func.func @transform_0(%arg0: i32, %arg1: i32) -> (i32, i32, i32) {
    %c0_i32 = arith.constant 0 : i32
    %c0_i32_0 = arith.constant 0 : i32
    return %arg0, %arg1, %c0_i32 : i32, i32, i32
  }
  func.func @transform_1(%arg0: i32, %arg1: i32) -> (i32, i32) {
    %c0_i32 = arith.constant 0 : i32
    %c0_i32_0 = arith.constant 0 : i32
    %c0_i32_1 = arith.constant 0 : i32
    return %c0_i32, %c0_i32_0 : i32, i32
  }
  func.func @transform_2(%arg0: i32, %arg1: i32) -> (i32, i32, i32) {
    %c0_i32 = arith.constant 0 : i32
    %c0_i32_0 = arith.constant 0 : i32
    return %arg0, %arg1, %c0_i32 : i32, i32, i32
  }
}

</mosaic_0001>

<llo_original>
// kernel: tpu_custom_call.1
$region0: #{tpu_custom_call.1}
  #allocation0 [shape = 'u32[]', space=smem, size = 0x4, offset = 0x4, fixed_abs, tag = 'smem constant byte address 0x4 - core index']
  #allocation1 [shape = 'u32[144,128]{1,0:T(1,128)}', space=vmem, size = 0x12000, scoped, tag = 'internal scratch']
  %s0 = inlined_call_operand.hbm [shape: f32[2,4,256], index: 0, kind: input, shape index: {}]
  %s1 = inlined_call_operand.hbm [shape: f32[2,256], index: 1, kind: input, shape index: {}]
  %s2 = inlined_call_operand.vmem [shape: f32[2,4,2], index: 2, kind: output, shape index: {}]
  %s3 = sld [smem:[#allocation0]]
  $region49: #{tpu_custom_call.1} parent=0
    _
  %s5 = ssub.s32 1, %s3
  %s6 = scalar_select 0, %s5, %s3
  $region1: #{tpu_custom_call.1} parent=0
    #allocation2 [shape = 'u8[8192]{0}', space=vmem, size = 0x2000, scoped, tag = 'input window, operand 0']
    #allocation3 [shape = 's32[2]{0}', space=sflag, size = 0x8, scoped, tag = 'scoped memory for tpu_custom_call.1']
    #allocation4 [shape = 'u8[2048]{0}', space=vmem, size = 0x800, scoped, tag = 'input window, operand 1, single buffered']
    #allocation5 [shape = 's32[1]{0}', space=sflag, size = 0x4, scoped, tag = 'scoped memory for tpu_custom_call.1']
    %7 = vsyncpa [#allocation3], 0
    %s8 = scalar_lea.sflag [#allocation3], 1
    %9 = vsyncpa %s8, 0
    %10 = vsyncpa [#allocation5], 0
    loop: start=0, step=1, limit=4
    $region2: #{tpu_custom_call.1} parent=1 // loop_pre_header
      _
    $region3: #{tpu_custom_call.1} parent=1 // loop_header
      %s12 = sphi 0, %s16
      %p13 = scmp.ge.s32.totalorder %s12, 4
      %s19 = sphi 0, %s31
      %s20 = sphi 0, %s27
      %s21 = sphi 0, %s19
      %s22 = sphi 0, %s20
      %s23 = sphi 0, %s21
      %s24 = sphi 0, %s22
      %s36 = sphi 0, %s38
      %s39 = sphi 0, %s36
      %s40 = sphi 0, %s39
      %s56 = sphi 0, %s40
      %s60 = sphi 0, %s60
      %s62 = sphi 0, %s60
      %s63 = sphi 0, %s62
      %s77 = sphi 0, %s63
      %s85 = sphi 0, %s87
      %s88 = sphi 0, %s85
      %s89 = sphi 0, %s88
      %s105 = sphi 0, %s89
    $region4: #{tpu_custom_call.1} parent=1 // loop_header_branch
      %15 = sbr.rel (%p13) target = $region8
    $region5: #{tpu_custom_call.1} parent=1 // loop_body
      %s17 = ssub.s32 %s12, 1
      %s18 = ssub.s32 %s12, 2
      %s25 = sadd.s32 1, %s20
      %p26 = scmp.ge.s32.totalorder %s25, 1
      %s27 = scalar_select %p26, 0, %s25
      %s28 = sadd.s32 1, %s19
      %s29 = scalar_select %p26, %s28, %s19
      %p30 = scmp.ge.s32.totalorder %s29, 2
      %s31 = scalar_select %p30, 0, %s29
      %s32 = ssub.s32 %s19, %s31
      %s33 = ssub.s32 %s20, %s27
      %s34 = sor.u32 %s32, %s33
      %p35 = scmp.eq.s32.totalorder %s34, 0
      %s37 = sadd.s32 %s36, 1
      %s38 = scalar_select %p35, %s36, %s37
      %p41 = pneg %p35
      %p42 = scmp.eq.s32.totalorder %s12, 1
      %p43 = por %p41, %p42
      %p44 = scmp.ne.s32.totalorder %s36, %s39
      %p45 = scmp.eq.s32.totalorder %s12, 0
      %p46 = por %p44, %p45
      %p47 = scmp.ne.s32.totalorder %s36, %s39
      %p48 = scmp.eq.s32.totalorder %s17, 1
      %p49 = por %p47, %p48
      %p50 = scmp.ne.s32.totalorder %s39, %s40
      %p51 = scmp.eq.s32.totalorder %s17, 0
      %p52 = por %p50, %p51
      %p53 = scmp.ne.s32.totalorder %s39, %s40
      %p54 = scmp.eq.s32.totalorder %s18, 1
      %p55 = por %p53, %p54
      %p57 = scmp.ne.s32.totalorder %s40, %s56
      %p58 = scmp.eq.s32.totalorder %s18, 0
      %p59 = por %p57, %p58
      %s61 = sadd.s32 %s60, 1
      %p64 = scmp.eq.s32.totalorder %s12, 1
      %p65 = scmp.ne.s32.totalorder %s60, %s62
      %p66 = scmp.eq.s32.totalorder %s12, 0
      %p67 = por %p65, %p66
      %p68 = scmp.ne.s32.totalorder %s60, %s62
      %p69 = scmp.eq.s32.totalorder %s17, 1
      %p70 = por %p68, %p69
      %p71 = scmp.ne.s32.totalorder %s62, %s63
      %p72 = scmp.eq.s32.totalorder %s17, 0
      %p73 = por %p71, %p72
      %p74 = scmp.ne.s32.totalorder %s62, %s63
      %p75 = scmp.eq.s32.totalorder %s18, 1
      %p76 = por %p74, %p75
      %p78 = scmp.ne.s32.totalorder %s63, %s77
      %p79 = scmp.eq.s32.totalorder %s18, 0
      %p80 = por %p78, %p79
      %s81 = ssub.s32 %s19, %s31
      %s82 = ssub.s32 %s20, %s27
      %s83 = sor.u32 %s81, %s82
      %p84 = scmp.eq.s32.totalorder %s83, 0
      %s86 = sadd.s32 %s85, 1
      %s87 = scalar_select %p84, %s85, %s86
      %p90 = pneg %p84
      %p91 = scmp.eq.s32.totalorder %s12, 1
      %p92 = por %p90, %p91
      %p93 = scmp.ne.s32.totalorder %s85, %s88
      %p94 = scmp.eq.s32.totalorder %s12, 0
      %p95 = por %p93, %p94
      %p96 = scmp.ne.s32.totalorder %s85, %s88
      %p97 = scmp.eq.s32.totalorder %s17, 1
      %p98 = por %p96, %p97
      %p99 = scmp.ne.s32.totalorder %s88, %s89
      %p100 = scmp.eq.s32.totalorder %s17, 0
      %p101 = por %p99, %p100
      %p102 = scmp.ne.s32.totalorder %s88, %s89
      %p103 = scmp.eq.s32.totalorder %s18, 1
      %p104 = por %p102, %p103
      %p106 = scmp.ne.s32.totalorder %s89, %s105
      %p107 = scmp.eq.s32.totalorder %s18, 0
      %p108 = por %p106, %p107
      %p109 = scmp.le.s32.totalorder 1, %s12
      %p110 = scmp.lt.s32.totalorder %s12, 3
      %p111 = pnand %p109, %p110
      %p112 = pneg %p111
      // Predicated region
      $region9: #{tpu_custom_call.1} parent=5 // pred_check
        _
      $region10: #{tpu_custom_call.1} parent=5 // pred_check_branch
        %114 = sbr.rel (%p111) target = $region12
      $region11: #{tpu_custom_call.1} parent=5 // pred_region
        %s115 = ssub.s32 %s12, 1
        // Predicated region
        $region13: #{tpu_custom_call.1} parent=11 // pred_check
          %p116 = pneg %p73
        $region14: #{tpu_custom_call.1} parent=11 // pred_check_branch
          %118 = sbr.rel (%p116) target = $region16
        $region15: #{tpu_custom_call.1} parent=11 // pred_region
          %s120 = ssub.s32 64, 64
          %121 = vsyncadd [#allocation5], %s120
          %s123 = sshll.u32 [#allocation4], 4
          %s124 = int_to_ptr.vmem [resolvable:$true] %s123
          %126 = dma.hbm_to_vmem [thread:$0]  %s1, 64, %s124, [#allocation5]
        $region16: #{tpu_custom_call.1} parent=11 // pred_fallthru
          _
      $region12: #{tpu_custom_call.1} parent=5 // pred_fallthru
        _
      %p127 = scmp.lt.s32.totalorder %s12, 2
      // Predicated region
      $region17: #{tpu_custom_call.1} parent=5 // pred_check
        %p128 = pneg %p127
      $region18: #{tpu_custom_call.1} parent=5 // pred_check_branch
        %130 = sbr.rel (%p128) target = $region20
      $region19: #{tpu_custom_call.1} parent=5 // pred_region
        // Predicated region
        $region21: #{tpu_custom_call.1} parent=19 // pred_check
          %p131 = pneg %p46
        $region22: #{tpu_custom_call.1} parent=19 // pred_check_branch
          %133 = sbr.rel (%p131) target = $region24
        $region23: #{tpu_custom_call.1} parent=19 // pred_region
          %s134 = sand.u32 %s36, 1
          %s135 = scalar_lea.sflag [#allocation3], %s134
          %s136 = sand.u32 %s36, 1
          %s137 = smul.addr %s136, 8
          %s138 = scalar_lea.vmem [#allocation2], %s137
          %s140 = ssub.s32 128, 128
          %141 = vsyncadd %s135, %s140
          %s142 = smul.addr %s20, 2
          %s143 = smul.addr %s19, 2
          %s144 = sadd.s32 %s142, %s143
          %s145 = smul.addr %s144, 64
          %s146 = scalar_lea.hbm %s0, %s145
          %s148 = sshll.u32 %s138, 4
          %s149 = int_to_ptr.vmem [resolvable:$true] %s148
          %151 = dma.hbm_to_vmem [thread:$0]  %s146, 128, %s149, %s135
        $region24: #{tpu_custom_call.1} parent=19 // pred_fallthru
          _
      $region20: #{tpu_custom_call.1} parent=5 // pred_fallthru
        _
      %p152 = scmp.le.s32.totalorder 1, %s12
      %p153 = scmp.lt.s32.totalorder %s12, 3
      %p154 = pnand %p152, %p153
      %p155 = pneg %p154
      // Predicated region
      $region25: #{tpu_custom_call.1} parent=5 // pred_check
        _
      $region26: #{tpu_custom_call.1} parent=5 // pred_check_branch
        %157 = sbr.rel (%p154) target = $region28
      $region27: #{tpu_custom_call.1} parent=5 // pred_region
        %s158 = ssub.s32 %s12, 1
        %s159 = sand.u32 %s39, 1
        %s160 = scalar_lea.sflag [#allocation3], %s159
        %s161 = sand.u32 %s39, 1
        %s162 = smul.addr %s161, 8
        %s163 = scalar_lea.vmem [#allocation2], %s162
        // Predicated region
        $region29: #{tpu_custom_call.1} parent=27 // pred_check
          %p164 = pneg %p52
        $region30: #{tpu_custom_call.1} parent=27 // pred_check_branch
          %166 = sbr.rel (%p164) target = $region32
        $region31: #{tpu_custom_call.1} parent=27 // pred_region
          %167 = dma.done %s160, 128
        $region32: #{tpu_custom_call.1} parent=27 // pred_fallthru
          _
        // Predicated region
        $region33: #{tpu_custom_call.1} parent=27 // pred_check
          %p168 = pneg %p73
        $region34: #{tpu_custom_call.1} parent=27 // pred_check_branch
          %170 = sbr.rel (%p168) target = $region36
        $region35: #{tpu_custom_call.1} parent=27 // pred_region
          %171 = dma.done [#allocation5], 64
        $region36: #{tpu_custom_call.1} parent=27 // pred_fallthru
          _
        %s172 = sand.u32 %s39, 1
        %s173 = scalar_lea.sflag [#allocation3], %s172
        %s174 = sand.u32 %s39, 1
        %s175 = smul.addr %s174, 8
        %s176 = scalar_lea.vmem [#allocation2], %s175
        %p177 = pneg %p52
        %p178 = pneg %p49
        %p179 = pneg %p73
        %p180 = pneg %p70
        %p181 = pneg %p101
        %p182 = pneg %p98
        %p183 = scmp.lt.s32.totalorder %s21, 1
        %s184 = scalar_select %p183, %s21, 1
        %p185 = scmp.lt.s32.totalorder %s22, 0
        %s186 = scalar_select %p185, %s22, 0
        %s187 = sadd.s32 %s186, %s184
        %s188 = smul.addr %s187, 4
        %s189 = scalar_lea.vmem %s2, %s188
        %p190 = scmp.lt.s32.totalorder %s21, 1
        %s191 = scalar_select %p190, %s21, 1
        %p192 = scmp.lt.s32.totalorder %s22, 0
        %s193 = scalar_select %p192, %s22, 0
        %s194 = sadd.s32 %s193, %s191
        %s195 = smul.addr %s194, 4
        %s196 = scalar_lea.vmem %s2, %s195
        %v197 = vld [vmem:[%s163] sm:$0xff]
        %v198 = vld [vmem:[#allocation4] ss:$2 sm:$0x3]
        %s199 = scalar_lea.vmem [#allocation4], 1
        %v200 = vld [vmem:[%s199] ss:$2 sm:$0x3]
        %v202 = vcombine.high %v197, %v197
        %vm204 = vcmask 1043456
        %v205 = vsel %vm204, %v197, 0.0
        %v206 = vsel %vm204, %v202, 0.0
        %v207 = vadd.f32 %v205, %v206
        %208 = vadd.xlane.f32.xlu0 %v207
        %v209 = vpop.xlane.xlu0 %208
        %v211 = vlaneseq
        %v212 = vshrl.u32 %v211, 7
        %v213 = vsub.s32 0, %v212
        %v214 = vrot.slane %v198, %v213
        %v215 = vlaneseq
        %v216 = vshrl.u32 %v215, 7
        %v217 = vsub.s32 1, %v216
        %v218 = vrot.slane %v198, %v217
        %v219 = vcombine.low %v214, %v218
        %v221 = vmul.f32 %v197, %v219
        %v223 = vcombine.high %v221, %v221
        %v225 = vsel %vm204, %v221, 0.0
        %v226 = vsel %vm204, %v223, 0.0
        %v227 = vadd.f32 %v225, %v226
        %228 = vadd.xlane.f32.xlu0 %v227
        %v229 = vpop.xlane.xlu0 %228
        %v231 = vlaneseq
        %v232 = vshrl.u32 %v231, 7
        %v233 = vsub.s32 0, %v232
        %v234 = vrot.slane %v200, %v233
        %v235 = vlaneseq
        %v236 = vshrl.u32 %v235, 7
        %v237 = vsub.s32 1, %v236
        %v238 = vrot.slane %v200, %v237
        %v239 = vcombine.low %v234, %v238
        %v241 = vmul.f32 %v197, %v239
        %v243 = vcombine.high %v241, %v241
        %v245 = vsel %vm204, %v241, 0.0
        %v246 = vsel %vm204, %v243, 0.0
        %v247 = vadd.f32 %v245, %v246
        %248 = vadd.xlane.f32.xlu0 %v247
        %v249 = vpop.xlane.xlu0 %248
        %v250 = vadd.f32 %v209, 0.000256
        %v251 = vrcp.pop %v250
        %v252 = vmul.f32 1.0, %v251
        %v253 = vadd.f32 %v229, 0.0
        %v254 = vmul.f32 %v253, %v252
        %v255 = vadd.f32 %v249, -3.8146973e-12
        %v256 = vmul.f32 %v255, %v252
        %vm257 = vcmask 7168
        %v258 = vsel %vm257, %v254, %v256
        %vm259 = vcmask 11264
        %260 = vst.msk [vmem:[%s196] sm:$0xf] %vm259, %v258
        %p261 = scmp.lt.s32.totalorder %s21, 1
        %s262 = scalar_select %p261, %s21, 1
        %p263 = scmp.lt.s32.totalorder %s22, 0
        %s264 = scalar_select %p263, %s22, 0
        %s265 = sadd.s32 %s264, %s262
        %s266 = smul.addr %s265, 4
        %s267 = scalar_lea.vmem %s2, %s266
        // Predicated region
        $region37: #{tpu_custom_call.1} parent=27 // pred_check
          %p268 = pneg %p98
        $region38: #{tpu_custom_call.1} parent=27 // pred_check_branch
          %270 = sbr.rel (%p268) target = $region40
        $region39: #{tpu_custom_call.1} parent=27 // pred_region
          _
        $region40: #{tpu_custom_call.1} parent=27 // pred_fallthru
          _
      $region28: #{tpu_custom_call.1} parent=5 // pred_fallthru
        _
      %p271 = scmp.le.s32.totalorder 2, %s12
      // Predicated region
      $region41: #{tpu_custom_call.1} parent=5 // pred_check
        %p272 = pneg %p271
      $region42: #{tpu_custom_call.1} parent=5 // pred_check_branch
        %274 = sbr.rel (%p272) target = $region44
      $region43: #{tpu_custom_call.1} parent=5 // pred_region
        %s275 = ssub.s32 %s12, 2
        // Predicated region
        $region45: #{tpu_custom_call.1} parent=43 // pred_check
          %p276 = pneg %p104
        $region46: #{tpu_custom_call.1} parent=43 // pred_check_branch
          %278 = sbr.rel (%p276) target = $region48
        $region47: #{tpu_custom_call.1} parent=43 // pred_region
          %p279 = scmp.lt.s32.totalorder %s23, 1
          %s280 = scalar_select %p279, %s23, 1
          %p281 = scmp.lt.s32.totalorder %s24, 0
          %s282 = scalar_select %p281, %s24, 0
          %s283 = sadd.s32 %s282, %s280
          %s284 = smul.addr %s283, 4
          %s285 = scalar_lea.vmem %s2, %s284
        $region48: #{tpu_custom_call.1} parent=43 // pred_fallthru
          _
      $region44: #{tpu_custom_call.1} parent=5 // pred_fallthru
        _
    $region6: #{tpu_custom_call.1} parent=1 // loop_footer
      %s16 = sadd.s32 1, %s12
    $region7: #{tpu_custom_call.1} parent=1 // loop_footer_branch
      %11 = sbr.rel target = $region3
    $region8: #{tpu_custom_call.1} parent=1 // loop_exit
      _
    %286 = vsyncpa [#allocation3], 1
    %s287 = scalar_lea.sflag [#allocation3], 1
    %288 = vsyncpa %s287, 1
    %289 = vsyncpa [#allocation5], 1

</llo_original>
